<compile_context>
chip_gen: v5e
topology: v5e:2x2
jax: 0.10.0
libtpu: 0.0.40
codegen_flags: <defaults>
</compile_context>

<pallas_src>
import functools

import numpy as np
import jax
import jax.numpy as jnp
from jax import lax
from jax.experimental import pallas as pl
from jax.experimental.pallas import tpu as pltpu


# ---------------------------------------------------------------------------
# Generation-aware tiling helpers
# ---------------------------------------------------------------------------

def _vmem_budgets():
    """Per-tile budget and scoped-VMEM limit derived from the chip's VMEM."""
    cap = 64 * 1024 * 1024  # conservative fallback, safe on every generation
    try:
        info = pltpu.get_tpu_info()
        cap = int(getattr(info, "vmem_capacity_bytes", cap)) or cap
    except Exception:
        pass
    # v5e/v6e (128 MiB): ~12.8 MiB tiles, 96 MiB limit; v7x (64 MiB): ~6.4 / 48.
    tile_budget = max(2 * 1024 * 1024, min(16 * 1024 * 1024, cap // 10))
    vmem_limit = max(32 * 1024 * 1024, min(100 * 1024 * 1024, (cap * 3) // 4))
    return tile_budget, vmem_limit


def _pick_divisor8(n, cap):
    """Largest divisor of n <= cap that is a multiple of 8, else full extent.

    Used for second-minor block dims, which must be multiples of 8 or the full
    array extent (the (8,128) constraint)."""
    n = int(n)
    cap = int(max(1, cap))
    if n <= cap:
        return n
    for t in range(cap - (cap % 8), 7, -8):
        if n % t == 0:
            return t
    return n  # fall back to the full extent (always layout-legal)


def _pick_divisor(n, cap):
    """Largest divisor of n <= cap (leading block dims, no layout constraint)."""
    n = int(n)
    cap = int(max(1, cap))
    if n <= cap:
        return n
    for t in range(cap, 0, -1):
        if n % t == 0:
            return t
    return 1


# ---------------------------------------------------------------------------
# Fused teacher softmax + center column-sum (single pass over teacher logits)
# ---------------------------------------------------------------------------

def _teacher_softmax_center_kernel(x_ref, c_ref, prob_ref, newc_ref, *,
                                   inv_temp, momentum):
    i = pl.program_id(0)
    x = x_ref[...]

    z = (x - c_ref[...]) * inv_temp
    z = z - jnp.max(z, axis=-1, keepdims=True)
    e = jnp.exp(z)
    # exact divide: the denominator feeds the teacher probabilities linearly.
    prob_ref[...] = e / jnp.sum(e, axis=-1, keepdims=True)

    @pl.when(i == 0)
    def _():
        newc_ref[...] = jnp.zeros_like(newc_ref)

    newc_ref[...] += jnp.sum(x, axis=0, keepdims=True)

    @pl.when(i == pl.num_programs(0) - 1)
    def _():
        # non-distributed branch: mean over the size-1 leading dim is identity.
        newc_ref[...] = c_ref[...] * momentum + newc_ref[...] * (1.0 - momentum)


def teacher_softmax_center(x, center, temp, momentum, tile_budget, vmem_limit):
    n, d = x.shape
    tm = _pick_divisor8(n, max(1, tile_budget // max(1, 8 * int(d))))
    kernel = functools.partial(_teacher_softmax_center_kernel,
                               inv_temp=1.0 / float(temp),
                               momentum=float(momentum))
    prob, new_center = pl.pallas_call(
        kernel,
        out_shape=(jax.ShapeDtypeStruct((n, d), jnp.float32),
                   jax.ShapeDtypeStruct((1, d), jnp.float32)),
        grid=(n // tm,),
        in_specs=[pl.BlockSpec((tm, d), lambda i: (i, 0)),
                  pl.BlockSpec((1, d), lambda i: (0, 0))],
        out_specs=[pl.BlockSpec((tm, d), lambda i: (i, 0)),
                   pl.BlockSpec((1, d), lambda i: (0, 0))],
        compiler_params=pltpu.CompilerParams(
            dimension_semantics=("arbitrary",), vmem_limit_bytes=vmem_limit),
    )(x, center)
    return prob, new_center


# ---------------------------------------------------------------------------
# L2 normalize (emits bf16 features; they only feed the similarity argmax)
# ---------------------------------------------------------------------------

def _l2_normalize_kernel(x_ref, o_ref):
    x = x_ref[...]
    ssq = jnp.sum(x * x, axis=-1, keepdims=True)
    # F.normalize(p=2, eps=1e-12): x / max(||x||, 1e-12) == x * rsqrt(max(ssq, 1e-24))
    o_ref[...] = (x * lax.rsqrt(jnp.maximum(ssq, 1e-24))).astype(o_ref.dtype)


def l2_normalize(x, tile_budget=None, vmem_limit=None):
    if tile_budget is None or vmem_limit is None:
        tile_budget, vmem_limit = _vmem_budgets()
    n, d = x.shape
    tm = _pick_divisor8(n, max(1, tile_budget // max(1, 6 * int(d))))
    return pl.pallas_call(
        _l2_normalize_kernel,
        out_shape=jax.ShapeDtypeStruct((n, d), jnp.bfloat16),
        grid=(n // tm,),
        in_specs=[pl.BlockSpec((tm, d), lambda i: (i, 0))],
        out_specs=pl.BlockSpec((tm, d), lambda i: (i, 0)),
        compiler_params=pltpu.CompilerParams(
            dimension_semantics=("parallel",), vmem_limit_bytes=vmem_limit),
    )(x)


# ---------------------------------------------------------------------------
# Class-token CE, fused over all (teacher chunk, student crop) pairs
# grid = (iq, batch_tile, student_crop); loss accumulates in the output block.
# ---------------------------------------------------------------------------

def _cls_loss_kernel(vmap_ref, t_ref, s_ref, o_ref, *, inv_temp, scale):
    del vmap_ref  # used only by the index maps
    bt = pl.program_id(1)
    vi = pl.program_id(2)

    @pl.when((bt == 0) & (vi == 0))
    def _():
        o_ref[...] = jnp.zeros_like(o_ref)

    q = t_ref[0]                              # [TB, D] teacher probs (f32)
    s = s_ref[0] * inv_temp                   # [TB, D] student logits / temp

    m = jnp.max(s, axis=-1, keepdims=True)
    lse = m + jnp.log(jnp.sum(jnp.exp(s - m), axis=-1, keepdims=True))      # [TB,1]
    # -sum(q * log_softmax(s)) = lse * sum(q) - sum(q * s)
    per_row = lse * jnp.sum(q, axis=-1, keepdims=True) \
        - jnp.sum(q * s, axis=-1, keepdims=True)                            # [TB,1]
    o_ref[...] += scale * jnp.sum(per_row)


def _cls_pairs_loss(t_cls3, s_cls3, vmap, batch_size, inv_temp,
                    tile_budget, vmem_limit):
    _, b, d = t_cls3.shape
    n_v = int(vmap.shape[1])
    tb = _pick_divisor8(b, max(1, tile_budget // max(1, 8 * int(d))))
    nbt = b // tb
    kernel = functools.partial(_cls_loss_kernel, inv_temp=inv_temp,
                               scale=0.5 / float(batch_size))
    gs = pltpu.PrefetchScalarGridSpec(
        num_scalar_prefetch=1,
        grid=(2, nbt, n_v),
        in_specs=[pl.BlockSpec((1, tb, d), lambda iq, bt, vi, vm: (iq, bt, 0)),
                  pl.BlockSpec((1, tb, d), lambda iq, bt, vi, vm: (vm[iq, vi], bt, 0))],
        out_specs=pl.BlockSpec((1, 8, 128), lambda iq, bt, vi, vm: (iq, 0, 0)),
    )
    out = pl.pallas_call(
        kernel,
        out_shape=jax.ShapeDtypeStruct((2, 8, 128), jnp.float32),
        grid_spec=gs,
        compiler_params=pltpu.CompilerParams(
            dimension_semantics=("parallel", "arbitrary", "arbitrary"),
            vmem_limit_bytes=vmem_limit),
    )(vmap, t_cls3, s_cls3)
    return jnp.sum(out[:, 0, 0])


# ---------------------------------------------------------------------------
# Region CE for one student-crop-size group
# grid = (iq, batch_tile, student_crop); same accumulation/reuse structure.
# ---------------------------------------------------------------------------

def _region_loss_kernel(vmap_ref, s_reg_ref, s_fea_ref, t_reg_ref, t_fea_ref,
                        o_ref, *, inv_temp, scale):
    del vmap_ref  # used only by the index maps
    bt = pl.program_id(1)
    vi = pl.program_id(2)

    @pl.when((bt == 0) & (vi == 0))
    def _():
        o_ref[...] = jnp.zeros_like(o_ref)

    s = s_reg_ref[0] * inv_temp               # [TB, S, D] f32
    s_fea = s_fea_ref[0]                      # [TB, S, F] bf16 (pre-normalized)
    t_reg = t_reg_ref[0]                      # [TB, P, D] f32 teacher probs
    t_fea = t_fea_ref[0]                      # [TB, P, F] bf16 (pre-normalized)

    # similarity only feeds an argmax -> single-pass bf16 on the MXU
    sim = jnp.einsum('bsf,bpf->bsp', s_fea, t_fea,
                     preferred_element_type=jnp.float32)                    # [TB,S,P]
    tb_, s_len, p_len = sim.shape

    # first-max argmax built from supported primitives
    iota = lax.broadcasted_iota(jnp.int32, sim.shape, 2)
    is_max = sim >= jnp.max(sim, axis=-1, keepdims=True)
    ind = jnp.min(jnp.where(is_max, iota, jnp.int32(p_len)), axis=-1, keepdims=True)
    onehot = (iota == ind).astype(jnp.float32)                              # [TB,S,P]

    # 0/1 gather of teacher probability rows: 3-pass bf16 is lossless here
    t_idx = jnp.einsum('bsp,bpd->bsd', onehot, t_reg,
                       precision=lax.Precision.HIGH,
                       preferred_element_type=jnp.float32)                  # [TB,S,D]

    m = jnp.max(s, axis=-1, keepdims=True)
    lse = m + jnp.log(jnp.sum(jnp.exp(s - m), axis=-1, keepdims=True))      # [TB,S,1]
    per_patch = lse * jnp.sum(t_idx, axis=-1, keepdims=True) \
        - jnp.sum(t_idx * s, axis=-1, keepdims=True)                        # [TB,S,1]
    o_ref[...] += scale * jnp.sum(per_patch)


def _region_pairs_loss(s_reg4, s_fea4, t_reg4, t_fea4, vmap, batch_size,
                       inv_temp, tile_budget, vmem_limit):
    _, b, s_len, d = s_reg4.shape
    _, _, p_len, f = t_fea4.shape
    n_v = int(vmap.shape[1])
    per_b_bytes = 4 * s_len * d + 2 * s_len * f + 4 * p_len * d + 2 * p_len * f
    tb = _pick_divisor(b, max(1, tile_budget // max(1, per_b_bytes)))
    nbt = b // tb
    kernel = functools.partial(_region_loss_kernel, inv_temp=inv_temp,
                               scale=0.5 / (float(batch_size) * float(s_len)))
    # NOTE: if profiling shows exposed DMA on the student-side blocks, add
    #       pipeline_mode=pl.Buffered(3) to the first two in_specs.
    gs = pltpu.PrefetchScalarGridSpec(
        num_scalar_prefetch=1,
        grid=(2, nbt, n_v),
        in_specs=[
            pl.BlockSpec((1, tb, s_len, d), lambda iq, bt, vi, vm: (vm[iq, vi], bt, 0, 0)),
            pl.BlockSpec((1, tb, s_len, f), lambda iq, bt, vi, vm: (vm[iq, vi], bt, 0, 0)),
            pl.BlockSpec((1, tb, p_len, d), lambda iq, bt, vi, vm: (iq, bt, 0, 0)),
            pl.BlockSpec((1, tb, p_len, f), lambda iq, bt, vi, vm: (iq, bt, 0, 0)),
        ],
        out_specs=pl.BlockSpec((1, 8, 128), lambda iq, bt, vi, vm: (iq, 0, 0)),
    )
    out = pl.pallas_call(
        kernel,
        out_shape=jax.ShapeDtypeStruct((2, 8, 128), jnp.float32),
        grid_spec=gs,
        compiler_params=pltpu.CompilerParams(
            dimension_semantics=("parallel", "arbitrary", "arbitrary"),
            vmem_limit_bytes=vmem_limit),
    )(vmap, s_reg4, s_fea4, t_reg4, t_fea4)
    return jnp.sum(out[:, 0, 0])


# ---------------------------------------------------------------------------
# Forward wrapper (glue: chunking / grouping of crops)
# ---------------------------------------------------------------------------

def ddino_loss_forward(center, center_grid,
                       s_cls_out, s_region_out, s_fea, s_npatch,
                       t_cls_out, t_region_out, t_fea, t_npatch, epoch, *,
                       ncrops, teacher_temp_schedule,
                       student_temp=0.1, center_momentum=0.9):
    tile_budget, vmem_limit = _vmem_budgets()
    teacher_temp = float(teacher_temp_schedule[epoch])
    inv_student_temp = 1.0 / float(student_temp)

    d = t_cls_out.shape[-1]
    f = t_fea.shape[-1]
    num_patches = int(t_npatch[0])
    batch_size = (t_region_out.shape[0] // 2) // num_patches

    # fused teacher softmax + center EMA update: one HBM pass per teacher tensor
    t_cls_prob, new_center = teacher_softmax_center(
        t_cls_out, center, teacher_temp, center_momentum, tile_budget, vmem_limit)
    t_region_prob, new_center_grid = teacher_softmax_center(
        t_region_out, center_grid, teacher_temp, center_momentum, tile_budget, vmem_limit)

    # L2-normalize features once; bf16 output halves downstream feature traffic
    t_fea_n = l2_normalize(t_fea, tile_budget, vmem_limit)
    s_fea_n = l2_normalize(s_fea, tile_budget, vmem_limit)

    # ---- class-token loss ----
    t_cls3 = t_cls_prob.reshape(2, batch_size, d)
    s_cls3 = s_cls_out.reshape(ncrops, batch_size, d)
    n_loss_terms = 2 * (ncrops - 1)
    cls_vmap = jnp.asarray([[v for v in range(ncrops) if v != iq] for iq in (0, 1)],
                           jnp.int32)                                   # (2, ncrops-1)
    total0 = _cls_pairs_loss(t_cls3, s_cls3, cls_vmap, batch_size,
                             inv_student_temp, tile_budget, vmem_limit) / n_loss_terms

    # ---- region loss (per student-crop-size group; groups are contiguous in
    #      the flat row layout, so 4-D views are reshapes of contiguous slices)
    t_reg4 = t_region_prob.reshape(2, batch_size, num_patches, d)
    t_fea4 = t_fea_n.reshape(2, batch_size, num_patches, f)

    s_split_size = [int(s_npatch[0])] * 2 + [int(s_npatch[1])] * (ncrops - 2)
    offs = np.cumsum([0] + [sl * batch_size for sl in s_split_size])

    groups = []
    start = 0
    while start < ncrops:
        sl = s_split_size[start]
        end = start
        while end < ncrops and s_split_size[end] == sl:
            end += 1
        groups.append((start, end, sl))
        start = end

    total1 = jnp.float32(0.0)
    for (g_start, g_end, sl) in groups:
        nc_g = g_end - g_start
        per_iq = [[v - g_start for v in range(g_start, g_end) if v != iq]
                  for iq in (0, 1)]
        assert len(per_iq[0]) == len(per_iq[1])
        n_v = len(per_iq[0])
        if n_v == 0:
            continue
        vmap_g = jnp.asarray(per_iq, jnp.int32)                         # (2, n_v)
        r0, r1 = int(offs[g_start]), int(offs[g_end])
        s_reg4 = s_region_out[r0:r1].reshape(nc_g, batch_size, sl, d)
        s_fea4 = s_fea_n[r0:r1].reshape(nc_g, batch_size, sl, f)
        total1 = total1 + _region_pairs_loss(
            s_reg4, s_fea4, t_reg4, t_fea4, vmap_g, batch_size,
            inv_student_temp, tile_budget, vmem_limit)
    total1 = total1 / n_loss_terms

    total = total0 + total1
    return total, {'global_loss': total0, 'local_loss': total1}, new_center, new_center_grid


# ---------------------------------------------------------------------------
# Pure numpy (float64) reference of the PyTorch forward, for verification
# ---------------------------------------------------------------------------

def _np_softmax(x, axis=-1):
    z = x - x.max(axis=axis, keepdims=True)
    e = np.exp(z)
    return e / e.sum(axis=axis, keepdims=True)


def _np_log_softmax(x, axis=-1):
    z = x - x.max(axis=axis, keepdims=True)
    return z - np.log(np.exp(z).sum(axis=axis, keepdims=True))


def reference_numpy(center, center_grid, s_cls_out, s_region_out, s_fea, s_npatch,
                    t_cls_out, t_region_out, t_fea, t_npatch, epoch, schedule,
                    ncrops, student_temp, center_momentum,
                    s_fea_norm=None, t_fea_norm=None):
    def l2n(x):
        return x / np.maximum(np.linalg.norm(x, axis=-1, keepdims=True), 1e-12)

    if s_fea_norm is None:
        s_fea_norm = l2n(s_fea)
    if t_fea_norm is None:
        t_fea_norm = l2n(t_fea)

    temp = schedule[epoch]
    t_cls = np.split(_np_softmax((t_cls_out - center) / temp), 2, axis=0)
    t_region = np.split(_np_softmax((t_region_out - center_grid) / temp), 2, axis=0)
    t_fea_c = np.split(t_fea_norm, 2, axis=0)
    num_patches = t_npatch[0]
    batch_size = t_region[0].shape[0] // num_patches
    s_cls = np.split(s_cls_out / student_temp, ncrops, axis=0)
    s_split_size = [s_npatch[0]] * 2 + [s_npatch[1]] * (ncrops - 2)
    s_split_size_bs = [i * batch_size for i in s_split_size]
    offs = np.cumsum([0] + s_split_size_bs)
    s_region = [s_region_out[offs[i]:offs[i + 1]] / student_temp for i in range(ncrops)]
    s_fea_c = [s_fea_norm[offs[i]:offs[i + 1]] for i in range(ncrops)]

    total = np.zeros(2, dtype=np.float64)
    n = 0
    for iq, q in enumerate(t_cls):
        for v in range(ncrops):
            if v == iq:
                continue
            loss = 0.5 * np.sum(-q * _np_log_softmax(s_cls[v]), axis=-1)
            total[0] += loss.mean()
            S = s_split_size[v]
            s_r = s_region[v].reshape(batch_size, S, -1)
            s_f = s_fea_c[v].reshape(batch_size, S, -1)
            t_r = t_region[iq].reshape(batch_size, num_patches, -1)
            t_f = t_fea_c[iq].reshape(batch_size, num_patches, -1)
            sim = np.matmul(s_f, np.transpose(t_f, (0, 2, 1)))
            ind = sim.argmax(axis=2)
            t_idx = np.take_along_axis(t_r, ind[:, :, None], axis=1)
            loss_grid = np.sum(-t_idx * _np_log_softmax(s_r), axis=-1).mean(-1)
            total[1] += (0.5 * loss_grid).mean()
            n += 1
    total /= n

    bc = t_cls_out.sum(axis=0, keepdims=True)        # non-dist: mean over size-1 dim = id
    bgc = t_region_out.sum(axis=0, keepdims=True)
    new_center = center * center_momentum + bc * (1 - center_momentum)
    new_center_grid = center_grid * center_momentum + bgc * (1 - center_momentum)
    return total.sum(), total[0], total[1], new_center, new_center_grid


# ---------------------------------------------------------------------------
# Demo
# ---------------------------------------------------------------------------

if __name__ == "__main__":
    out_dim = 32
    fea_dim = 16
    batch = 2
    ncrops = 4
    s_npatch = [16, 4]          # patches per global / local student crop
    t_npatch = [16]             # patches per teacher (global) crop
    num_patches = t_npatch[0]
    student_temp = 0.1
    center_momentum = 0.9
    warmup_teacher_temp, teacher_temp_final = 0.04, 0.07
    warmup_epochs, nepochs = 3, 10
    epoch = 1
    schedule = np.concatenate((
        np.linspace(warmup_teacher_temp, teacher_temp_final, warmup_epochs),
        np.ones(nepochs - warmup_epochs) * teacher_temp_final))

    key = jax.random.PRNGKey(0)
    ks = jax.random.split(key, 6)
    total_s_rows = (s_npatch[0] * 2 + s_npatch[1] * (ncrops - 2)) * batch
    s_cls_out = jax.random.normal(ks[0], (ncrops * batch, out_dim), jnp.float32)
    s_region_out = jax.random.normal(ks[1], (total_s_rows, out_dim), jnp.float32)
    s_fea = jax.random.normal(ks[2], (total_s_rows, fea_dim), jnp.float32)
    t_cls_out = jax.random.normal(ks[3], (2 * batch, out_dim), jnp.float32)
    t_region_out = jax.random.normal(ks[4], (2 * num_patches * batch, out_dim), jnp.float32)
    t_fea = jax.random.normal(ks[5], (2 * num_patches * batch, fea_dim), jnp.float32)

    # Buffers as in __init__: zeros of shape (1, out_dim)
    center = jnp.zeros((1, out_dim), jnp.float32)
    center_grid = jnp.zeros((1, out_dim), jnp.float32)

    total, logs, new_center, new_center_grid = ddino_loss_forward(
        center, center_grid,
        s_cls_out, s_region_out, s_fea, s_npatch,
        t_cls_out, t_region_out, t_fea, t_npatch, epoch,
        ncrops=ncrops, teacher_temp_schedule=schedule,
        student_temp=student_temp, center_momentum=center_momentum)

    jax.block_until_ready((total, logs['global_loss'], logs['local_loss'],
                           new_center, new_center_grid))

    # Verification.  Documented deviation from the f64 PyTorch math: features
    # are L2-normalized then stored as bf16 (nearest-patch argmax only), so
    # (1) check the normalize kernel against f64 at bf16 tolerance, and
    # (2) feed the kernel's normalized features to the f64 reference so the
    #     discrete argmax selection is shared; everything else stays float64.
    s_fea_n64 = np.asarray(l2_normalize(s_fea).astype(jnp.float32), np.float64)
    t_fea_n64 = np.asarray(l2_normalize(t_fea).astype(jnp.float32), np.float64)

    def _l2n64(x):
        return x / np.maximum(np.linalg.norm(x, axis=-1, keepdims=True), 1e-12)

    np.testing.assert_allclose(s_fea_n64, _l2n64(np.asarray(s_fea, np.float64)),
                               rtol=2e-2, atol=2e-2)
    np.testing.assert_allclose(t_fea_n64, _l2n64(np.asarray(t_fea, np.float64)),
                               rtol=2e-2, atol=2e-2)

    ref_total, ref_g, ref_l, ref_c, ref_cg = reference_numpy(
        np.asarray(center, np.float64), np.asarray(center_grid, np.float64),
        np.asarray(s_cls_out, np.float64), np.asarray(s_region_out, np.float64),
        np.asarray(s_fea, np.float64), s_npatch,
        np.asarray(t_cls_out, np.float64), np.asarray(t_region_out, np.float64),
        np.asarray(t_fea, np.float64), t_npatch, epoch, schedule,
        ncrops, student_temp, center_momentum,
        s_fea_norm=s_fea_n64, t_fea_norm=t_fea_n64)

    np.testing.assert_allclose(float(total), ref_total, rtol=2e-3, atol=2e-3)
    np.testing.assert_allclose(float(logs['global_loss']), ref_g, rtol=2e-3, atol=2e-3)
    np.testing.assert_allclose(float(logs['local_loss']), ref_l, rtol=2e-3, atol=2e-3)
    np.testing.assert_allclose(np.asarray(new_center), ref_c, rtol=2e-3, atol=2e-3)
    np.testing.assert_allclose(np.asarray(new_center_grid), ref_cg, rtol=2e-3, atol=2e-3)

    print("KERNEL_OK")
</pallas_src>

<mosaic_0001>
module attributes {stable_mosaic.version = 11 : i64} {
  func.func @_teacher_softmax_center_kernel(%arg0: i32, %arg1: memref<4x32xf32, #tpu.memory_space<vmem>>, %arg2: memref<1x32xf32, #tpu.memory_space<vmem>>, %arg3: memref<4x32xf32, #tpu.memory_space<vmem>>, %arg4: memref<1x32xf32, #tpu.memory_space<vmem>>) attributes {dimension_semantics = [#tpu.dimension_semantics<arbitrary>], iteration_bounds = array<i64: 1>, scalar_prefetch = 0 : i64, scratch_operands = 0 : i64, tpu.core_type = #tpu.core_type<tc>, window_params = [{transform_indices = @transform_0, window_bounds = array<i64: 4, 32>}, {pipeline_mode = #tpu.pipeline_mode<synchronous>, transform_indices = @transform_1, window_bounds = array<i64: 1, 32>}, {transform_indices = @transform_2, window_bounds = array<i64: 4, 32>}, {pipeline_mode = #tpu.pipeline_mode<synchronous>, transform_indices = @transform_3, window_bounds = array<i64: 1, 32>}]} {
    %c0 = arith.constant 0 : index
    %c0_0 = arith.constant 0 : index
    %0 = vector.load %arg1[%c0, %c0_0] : memref<4x32xf32, #tpu.memory_space<vmem>>, vector<4x32xf32>
    %c0_1 = arith.constant 0 : index
    %c0_2 = arith.constant 0 : index
    %1 = vector.load %arg2[%c0_1, %c0_2] : memref<1x32xf32, #tpu.memory_space<vmem>>, vector<1x32xf32>
    %2 = vector.broadcast %1 : vector<1x32xf32> to vector<4x32xf32>
    %3 = arith.subf %0, %2 : vector<4x32xf32>
    %cst = arith.constant 18.181818 : f32
    %4 = vector.broadcast %cst : f32 to vector<4x32xf32>
    %5 = arith.mulf %3, %4 : vector<4x32xf32>
    %cst_3 = arith.constant dense<0xFF800000> : vector<4xf32>
    %6 = vector.multi_reduction <maximumf>, %5, %cst_3 [1] : vector<4x32xf32> to vector<4xf32>
    %7 = vector.shape_cast %6 : vector<4xf32> to vector<4x1xf32>
    %8 = vector.broadcast %7 : vector<4x1xf32> to vector<4x32xf32>
    %9 = arith.subf %5, %8 : vector<4x32xf32>
    %10 = math.exp %9 : vector<4x32xf32>
    %cst_4 = arith.constant dense<0.000000e+00> : vector<4xf32>
    %11 = vector.multi_reduction <add>, %10, %cst_4 [1] : vector<4x32xf32> to vector<4xf32>
    %12 = vector.shape_cast %11 : vector<4xf32> to vector<4x1xf32>
    %13 = vector.broadcast %12 : vector<4x1xf32> to vector<4x32xf32>
    %14 = arith.divf %10, %13 : vector<4x32xf32>
    %c0_5 = arith.constant 0 : index
    %c0_6 = arith.constant 0 : index
    %15 = vector.load %arg3[%c0_5, %c0_6] : memref<4x32xf32, #tpu.memory_space<vmem>>, vector<4x32xf32>
    tpu.vector_store %arg3[%c0_5, %c0_6], %14 {strides = array<i32>} : memref<4x32xf32, #tpu.memory_space<vmem>>, vector<4x32xf32>,
    %c0_i32 = arith.constant 0 : i32
    %16 = arith.cmpi eq, %arg0, %c0_i32 : i32
    %17 = arith.extui %16 : i1 to i32
    %c0_i32_7 = arith.constant 0 : i32
    %18 = arith.cmpi ne, %17, %c0_i32_7 : i32
    scf.if %18 {
      %cst_15 = arith.constant 0.000000e+00 : f32
      %27 = vector.broadcast %cst_15 : f32 to vector<1x32xf32>
      %c0_16 = arith.constant 0 : index
      %c0_17 = arith.constant 0 : index
      %28 = vector.load %arg4[%c0_16, %c0_17] : memref<1x32xf32, #tpu.memory_space<vmem>>, vector<1x32xf32>
      tpu.vector_store %arg4[%c0_16, %c0_17], %27 {strides = array<i32>} : memref<1x32xf32, #tpu.memory_space<vmem>>, vector<1x32xf32>,
    } else {
    }
    %c0_8 = arith.constant 0 : index
    %c0_9 = arith.constant 0 : index
    %19 = vector.load %arg4[%c0_8, %c0_9] : memref<1x32xf32, #tpu.memory_space<vmem>>, vector<1x32xf32>
    %cst_10 = arith.constant dense<0.000000e+00> : vector<32xf32>
    %20 = vector.multi_reduction <add>, %0, %cst_10 [0] : vector<4x32xf32> to vector<32xf32>
    %21 = vector.shape_cast %20 : vector<32xf32> to vector<1x32xf32>
    %22 = arith.addf %19, %21 : vector<1x32xf32>
    %c0_11 = arith.constant 0 : index
    %c0_12 = arith.constant 0 : index
    %23 = vector.load %arg4[%c0_11, %c0_12] : memref<1x32xf32, #tpu.memory_space<vmem>>, vector<1x32xf32>
    tpu.vector_store %arg4[%c0_11, %c0_12], %22 {strides = array<i32>} : memref<1x32xf32, #tpu.memory_space<vmem>>, vector<1x32xf32>,
    %c0_i32_13 = arith.constant 0 : i32
    %24 = arith.cmpi eq, %arg0, %c0_i32_13 : i32
    %25 = arith.extui %24 : i1 to i32
    %c0_i32_14 = arith.constant 0 : i32
    %26 = arith.cmpi ne, %25, %c0_i32_14 : i32
    scf.if %26 {
      %c0_15 = arith.constant 0 : index
      %c0_16 = arith.constant 0 : index
      %27 = vector.load %arg2[%c0_15, %c0_16] : memref<1x32xf32, #tpu.memory_space<vmem>>, vector<1x32xf32>
      %cst_17 = arith.constant 0.899999976 : f32
      %28 = vector.broadcast %cst_17 : f32 to vector<1x32xf32>
      %29 = arith.mulf %27, %28 : vector<1x32xf32>
      %c0_18 = arith.constant 0 : index
      %c0_19 = arith.constant 0 : index
      %30 = vector.load %arg4[%c0_18, %c0_19] : memref<1x32xf32, #tpu.memory_space<vmem>>, vector<1x32xf32>
      %cst_20 = arith.constant 1.000000e-01 : f32
      %31 = vector.broadcast %cst_20 : f32 to vector<1x32xf32>
      %32 = arith.mulf %30, %31 : vector<1x32xf32>
      %33 = arith.addf %29, %32 : vector<1x32xf32>
      %c0_21 = arith.constant 0 : index
      %c0_22 = arith.constant 0 : index
      %34 = vector.load %arg4[%c0_21, %c0_22] : memref<1x32xf32, #tpu.memory_space<vmem>>, vector<1x32xf32>
      tpu.vector_store %arg4[%c0_21, %c0_22], %33 {strides = array<i32>} : memref<1x32xf32, #tpu.memory_space<vmem>>, vector<1x32xf32>,
    } else {
    }
    return
  }
  func.func @transform_0(%arg0: i32) -> (i32, i32) {
    %c0_i32 = arith.constant 0 : i32
    %c0_i32_0 = arith.constant 0 : i32
    return %arg0, %c0_i32 : i32, i32
  }
  func.func @transform_1(%arg0: i32) -> (i32, i32) {
    %c0_i32 = arith.constant 0 : i32
    %c0_i32_0 = arith.constant 0 : i32
    %c0_i32_1 = arith.constant 0 : i32
    return %c0_i32, %c0_i32_0 : i32, i32
  }
  func.func @transform_2(%arg0: i32) -> (i32, i32) {
    %c0_i32 = arith.constant 0 : i32
    %c0_i32_0 = arith.constant 0 : i32
    return %arg0, %c0_i32 : i32, i32
  }
  func.func @transform_3(%arg0: i32) -> (i32, i32) {
    %c0_i32 = arith.constant 0 : i32
    %c0_i32_0 = arith.constant 0 : i32
    %c0_i32_1 = arith.constant 0 : i32
    return %c0_i32, %c0_i32_0 : i32, i32
  }
}

</mosaic_0001>

<llo_original>
// kernel: tpu_custom_call.1
$region0: #{tpu_custom_call.1}
  #allocation0 [shape = 'u32[]', space=smem, size = 0x4, offset = 0x4, fixed_abs, tag = 'smem constant byte address 0x4 - core index']
  #allocation1 [shape = 'u32[72,128]{1,0:T(1,128)}', space=vmem, size = 0x9000, scoped, tag = 'internal scratch']
  %s0 = inlined_call_operand.hbm [shape: f32[4,32], index: 0, kind: input, shape index: {}]
  %s1 = inlined_call_operand.hbm [shape: f32[1,32], index: 1, kind: input, shape index: {}]
  %s2 = inlined_call_operand.hbm [shape: f32[4,32], index: 2, kind: output, shape index: {0}]
  %s3 = inlined_call_operand.hbm [shape: f32[1,32], index: 3, kind: output, shape index: {1}]
  %4 = xla_tuple %s2, %s3
  %s5 = sld [smem:[#allocation0]]
  $region42: #{tpu_custom_call.1} parent=0
    _
  %s7 = ssub.s32 1, %s5
  %s8 = scalar_select 0, %s7, %s5
  $region1: #{tpu_custom_call.1} parent=0
    #allocation2 [shape = 'u8[2048]{0}', space=vmem, size = 0x800, scoped, tag = 'input window, operand 0, single buffered']
    #allocation3 [shape = 's32[1]{0}', space=sflag, size = 0x4, scoped, tag = 'scoped memory for tpu_custom_call.1']
    #allocation4 [shape = 's32[1]{0}', space=sflag, size = 0x4, scoped, tag = 'scoped memory for tpu_custom_call.1']
    #allocation5 [shape = 'u8[512]{0}', space=vmem, size = 0x400, scoped, tag = 'input window, operand 1, single buffered']
    #allocation6 [shape = 's32[1]{0}', space=sflag, size = 0x4, scoped, tag = 'scoped memory for tpu_custom_call.1']
    #allocation7 [shape = 'u8[2048]{0}', space=vmem, size = 0x800, scoped, tag = 'output window, operand 0, single buffered']
    #allocation8 [shape = 'u8[512]{0}', space=vmem, size = 0x400, scoped, tag = 'output window, operand 1, single buffered']
    #allocation9 [shape = 's32[1]{0}', space=sflag, size = 0x4, scoped, tag = 'scoped memory for tpu_custom_call.1']
    %9 = vsyncpa [#allocation3], 0
    %10 = vsyncpa [#allocation6], 0
    %11 = vsyncpa [#allocation4], 0
    %12 = vsyncpa [#allocation9], 0
    // Predicated region
    $region2: #{tpu_custom_call.1} parent=1 // pred_check
      _
    $region3: #{tpu_custom_call.1} parent=1 // pred_check_branch
      %14 = sbr.rel (0) target = $region5
    $region4: #{tpu_custom_call.1} parent=1 // pred_region
      %16 = vsyncadd [#allocation3], 0
      %s18 = sshll.u32 %s0, 4
      %s19 = int_to_ptr.hbm [resolvable:$true] %s18
      %s20 = sshll.u32 [#allocation2], 4
      %s21 = int_to_ptr.vmem [resolvable:$true] %s20
      %23 = dma.hbm_to_vmem [thread:$0]  %s19, 64, %s21, [#allocation3]
    $region5: #{tpu_custom_call.1} parent=1 // pred_fallthru
      _
    // Predicated region
    $region6: #{tpu_custom_call.1} parent=1 // pred_check
      _
    $region7: #{tpu_custom_call.1} parent=1 // pred_check_branch
      %25 = sbr.rel (0) target = $region9
    $region8: #{tpu_custom_call.1} parent=1 // pred_region
      %27 = vsyncadd [#allocation6], 0
      %s29 = sshll.u32 %s1, 4
      %s30 = int_to_ptr.hbm [resolvable:$true] %s29
      %s31 = sshll.u32 [#allocation5], 4
      %s32 = int_to_ptr.vmem [resolvable:$true] %s31
      %34 = dma.hbm_to_vmem [thread:$0]  %s30, 16, %s32, [#allocation6]
    $region9: #{tpu_custom_call.1} parent=1 // pred_fallthru
      _
    // Predicated region
    $region10: #{tpu_custom_call.1} parent=1 // pred_check
      _
    $region11: #{tpu_custom_call.1} parent=1 // pred_check_branch
      %36 = sbr.rel (0) target = $region13
    $region12: #{tpu_custom_call.1} parent=1 // pred_region
      %38 = dma.done [#allocation3], 64
    $region13: #{tpu_custom_call.1} parent=1 // pred_fallthru
      _
    // Predicated region
    $region14: #{tpu_custom_call.1} parent=1 // pred_check
      _
    $region15: #{tpu_custom_call.1} parent=1 // pred_check_branch
      %40 = sbr.rel (0) target = $region17
    $region16: #{tpu_custom_call.1} parent=1 // pred_region
      %42 = dma.done [#allocation6], 16
    $region17: #{tpu_custom_call.1} parent=1 // pred_fallthru
      _
    %v43 = vld [vmem:[#allocation2] sm:$0xf]
    %v44 = vld [vmem:[#allocation5] sm:$0x1]
    %v46 = vperm.slane %v44, 0
    %v48 = vsub.f32 %v43, %v46
    %v49 = vmul.f32 %v48, 18.181818
    %vm50 = vcmask 257024
    %v51 = vsel %vm50, %v49, -inf
    %52 = vmax.xlane.f32.xlu0 %v51
    %v53 = vpop.xlane.xlu0 %52
    %v54 = vsub.f32 %v49, %v53
    %v55 = vmul.f32 %v54, 1.442695
    %v56 = vpow.pop %v55
    %v57 = vsel %vm50, %v56, 0.0
    %58 = vadd.xlane.f32.xlu0 %v57
    %v59 = vpop.xlane.xlu0 %58
    %v60 = vrcp.pop %v59
    %v61 = vmul.f32 %v59, %v60
    %v62 = vsub.f32 1.0, %v61
    %v63 = vmul.f32 %v60, %v62
    %v64 = vadd.f32 %v60, %v63
    %vm65 = vweird.f32 %v59
    %vm66 = vweird.f32 %v60
    %vm67 = vmor %vm65, %vm66
    %v68 = vsel %vm67, %v60, %v64
    %v69 = vand.u32 2147483647, %v59
    %vm70 = vcmp.eq.f32.partialorder %v69, 8.507059e+37
    %v71 = vand.u32 %v59, 2147483648
    %v72 = vor.u32 1.1754944e-38, %v71
    %v73 = vsel %vm70, %v72, %v68
    %v74 = vmul.f32 %v56, %v73
    %75 = vst.msk [vmem:[#allocation7] sm:$0xf] %vm50, %v74
    %p76 = scmp.eq.s32.totalorder 0, 0
    // Predicated region
    $region18: #{tpu_custom_call.1} parent=1 // pred_check
      %p77 = pneg %p76
    $region19: #{tpu_custom_call.1} parent=1 // pred_check_branch
      %79 = sbr.rel (%p77) target = $region21
    $region20: #{tpu_custom_call.1} parent=1 // pred_region
      %vm80 = vcmask 253952
      %81 = vst.msk [vmem:[#allocation8] sm:$0x1] %vm80, 0.0
    $region21: #{tpu_custom_call.1} parent=1 // pred_fallthru
      _
    %v82 = vld [vmem:[#allocation8] sm:$0x1]
    %v83 = vsel %vm50, %v43, 0.0
    %v84 = vrot.slane %v83, 4
    %v85 = vadd.f32 %v83, %v84
    %v86 = vrot.slane %v85, 2
    %v87 = vadd.f32 %v85, %v86
    %v88 = vrot.slane %v87, 1
    %v89 = vadd.f32 %v87, %v88
    %v90 = vadd.f32 %v82, %v89
    %vm91 = vcmask 253952
    %92 = vst.msk [vmem:[#allocation8] sm:$0x1] %vm91, %v90
    // Predicated region
    $region22: #{tpu_custom_call.1} parent=1 // pred_check
      %p93 = pneg %p76
    $region23: #{tpu_custom_call.1} parent=1 // pred_check_branch
      %95 = sbr.rel (%p93) target = $region25
    $region24: #{tpu_custom_call.1} parent=1 // pred_region
      %v96 = vld [vmem:[#allocation5] sm:$0x1]
      %v97 = vmul.f32 %v96, 0.9
      %v98 = vld [vmem:[#allocation8] sm:$0x1]
      %v99 = vmul.f32 %v98, 0.1
      %v100 = vadd.f32 %v97, %v99
      %101 = vst.msk [vmem:[#allocation8] sm:$0x1] %vm91, %v100
    $region25: #{tpu_custom_call.1} parent=1 // pred_fallthru
      _
    // Predicated region
    $region26: #{tpu_custom_call.1} parent=1 // pred_check
      _
    $region27: #{tpu_custom_call.1} parent=1 // pred_check_branch
      %103 = sbr.rel (0) target = $region29
    $region28: #{tpu_custom_call.1} parent=1 // pred_region
      %105 = vsyncadd [#allocation4], 0
      %s107 = sshll.u32 [#allocation7], 4
      %s108 = int_to_ptr.vmem [resolvable:$true] %s107
      %s109 = sshll.u32 %s2, 4
      %s110 = int_to_ptr.hbm [resolvable:$true] %s109
      %112 = dma.vmem_to_hbm [thread:$0]  %s108, 64, %s110, [#allocation4]
    $region29: #{tpu_custom_call.1} parent=1 // pred_fallthru
      _
    // Predicated region
    $region30: #{tpu_custom_call.1} parent=1 // pred_check
      _
    $region31: #{tpu_custom_call.1} parent=1 // pred_check_branch
      %114 = sbr.rel (0) target = $region33
    $region32: #{tpu_custom_call.1} parent=1 // pred_region
      %116 = vsyncadd [#allocation9], 0
      %s118 = sshll.u32 [#allocation8], 4
      %s119 = int_to_ptr.vmem [resolvable:$true] %s118
      %s120 = sshll.u32 %s3, 4
      %s121 = int_to_ptr.hbm [resolvable:$true] %s120
      %123 = dma.vmem_to_hbm [thread:$0]  %s119, 16, %s121, [#allocation9]
    $region33: #{tpu_custom_call.1} parent=1 // pred_fallthru
      _
    // Predicated region
    $region34: #{tpu_custom_call.1} parent=1 // pred_check
      _
    $region35: #{tpu_custom_call.1} parent=1 // pred_check_branch
      %125 = sbr.rel (0) target = $region37
    $region36: #{tpu_custom_call.1} parent=1 // pred_region
      %127 = dma.done [#allocation4], 64
    $region37: #{tpu_custom_call.1} parent=1 // pred_fallthru
      _
    // Predicated region
    $region38: #{tpu_custom_call.1} parent=1 // pred_check
      _
    $region39: #{tpu_custom_call.1} parent=1 // pred_check_branch
      %129 = sbr.rel (0) target = $region41
    $region40: #{tpu_custom_call.1} parent=1 // pred_region
      %131 = dma.done [#allocation9], 16
    $region41: #{tpu_custom_call.1} parent=1 // pred_fallthru
      _
    %132 = vsyncpa [#allocation3], 1
    %133 = vsyncpa [#allocation6], 1
    %134 = vsyncpa [#allocation4], 1
    %135 = vsyncpa [#allocation9], 1

</llo_original>
